<compile_context>
chip_gen: v5e
topology: v5e:2x2
jax: 0.10.0
libtpu: 0.0.40
codegen_flags: <defaults>
</compile_context>

<pallas_src>
import functools

import jax
import jax.numpy as jnp
from jax.experimental import pallas as pl
from jax.experimental.pallas import tpu as pltpu

LANES = 512        # lane-dense last dim (multiple of 128)
TILE_ROWS = 512    # rows per grid step when tiling; 512*512*4B = 1 MiB/block (f32)


def _stats_kernel(x_ref, sum_ref, ssq_ref, *, total, lanes, needs_mask):
    """Accumulate per-lane sum and sum-of-squares into resident (1, LANES) outputs."""
    i = pl.program_id(0)

    @pl.when(i == 0)
    def _():
        sum_ref[...] = jnp.zeros_like(sum_ref)
        ssq_ref[...] = jnp.zeros_like(ssq_ref)

    x = x_ref[...].astype(jnp.float32)
    if needs_mask:
        tile_r = x.shape[0]
        base = i * (tile_r * lanes)
        r = jax.lax.broadcasted_iota(jnp.int32, x.shape, 0)
        c = jax.lax.broadcasted_iota(jnp.int32, x.shape, 1)
        x = jnp.where((base + r * lanes + c) < total, x, 0.0)

    sum_ref[...] += jnp.sum(x, axis=0, keepdims=True)
    ssq_ref[...] += jnp.sum(x * x, axis=0, keepdims=True)


def _quant_kernel(stats_ref, x_ref, o_ref, *, a_bit):
    """Element-wise: normalize with precomputed (mean, 0.5/std), clamp, quantize."""
    m = stats_ref[0]       # mean(x)
    scale = stats_ref[1]   # 0.5 / std(x)  (reciprocal precomputed -> VPU mul only)

    x = x_ref[...].astype(jnp.float32)
    xc = jnp.clip((x - m) * scale, 0.0, 1.0)
    if a_bit == 1:
        q = jnp.sign(xc)
    else:
        n = float(2 ** a_bit - 1)
        q = jnp.round(xc * n) * (1.0 / n)
    o_ref[...] = q.astype(o_ref.dtype)


@functools.partial(jax.jit, static_argnames=("a_bit",))
def _lifequant_impl(x, a_bit):
    orig_shape = x.shape
    orig_dtype = x.dtype
    flat = x.reshape(-1)                     # keep original dtype in HBM
    total = flat.size

    # Lane-dense 2-D layout; tile rows only when the tensor is big enough.
    tile_elems = TILE_ROWS * LANES
    if total <= tile_elems:
        n_tiles = 1
        rows = pl.cdiv(total, LANES)
        tile_r = rows                        # single block == full array dims
    else:
        n_tiles = pl.cdiv(total, tile_elems)
        tile_r = TILE_ROWS
        rows = n_tiles * TILE_ROWS
    padded = rows * LANES
    needs_mask = padded != total
    if needs_mask:
        flat = jnp.pad(flat, (0, padded - total))
    x2 = flat.reshape(rows, LANES)

    # ---- pass 1: global sum / sum-of-squares (resident accumulator output) ----
    psum, psq = pl.pallas_call(
        functools.partial(_stats_kernel, total=total, lanes=LANES,
                          needs_mask=needs_mask),
        grid=(n_tiles,),
        in_specs=[pl.BlockSpec((tile_r, LANES), lambda i: (i, 0))],
        out_specs=(pl.BlockSpec((1, LANES), lambda i: (0, 0)),
                   pl.BlockSpec((1, LANES), lambda i: (0, 0))),
        out_shape=(jax.ShapeDtypeStruct((1, LANES), jnp.float32),
                   jax.ShapeDtypeStruct((1, LANES), jnp.float32)),
        compiler_params=pltpu.CompilerParams(
            dimension_semantics=("arbitrary",)),
    )(x2)

    # Tiny final reduction + scalar math in plain JAX (512 lanes -> scalar).
    s1 = jnp.sum(psum)
    s2 = jnp.sum(psq)
    nf = jnp.float32(total)
    mean = s1 / nf
    var = jnp.maximum((s2 - nf * mean * mean) / (nf - 1.0), 0.0)  # torch.std: unbiased
    std = jnp.sqrt(var)
    stats = jnp.stack([mean, jnp.float32(0.5) / std]).astype(jnp.float32)  # (2,)

    # ---- pass 2: element-wise normalize + clamp + uniform quantize ----
    out2 = pl.pallas_call(
        functools.partial(_quant_kernel, a_bit=a_bit),
        grid=(n_tiles,),
        in_specs=[pl.BlockSpec(memory_space=pltpu.MemorySpace.SMEM),     # (2,) scalars
                  pl.BlockSpec((tile_r, LANES), lambda i: (i, 0))],
        out_specs=pl.BlockSpec((tile_r, LANES), lambda i: (i, 0)),
        out_shape=jax.ShapeDtypeStruct((rows, LANES), orig_dtype),
        compiler_params=pltpu.CompilerParams(
            dimension_semantics=("parallel",)),
    )(stats, x2)

    out = out2.reshape(-1)
    if needs_mask:
        out = out[:total]
    return out.reshape(orig_shape)


def lifequant_forward(x, a_bit):
    """Forward pass of the PyTorch `lifequant` module (activation quantization)."""
    if a_bit == 32:
        return x
    return _lifequant_impl(x, a_bit)


# ----------------------------- pure-JAX reference -----------------------------

def lifequant_reference(x, a_bit):
    if a_bit == 32:
        return x
    m = jnp.mean(x)
    s = jnp.std(x, ddof=1)                       # torch.std default: unbiased
    xc = jnp.clip((x - m) / s * 0.5, 0.0, 1.0)
    if a_bit == 1:
        return jnp.sign(xc)
    n = 2 ** a_bit - 1
    return jnp.round(xc * n) / n


# TODO(synk): the straight-through-estimator backward of uniform_quantize_life
# (gradient pass-through) is training-only and not implemented here.

if __name__ == "__main__":
    key = jax.random.PRNGKey(0)
    # activation-like tensor: (batch=2, channels=4, spatial=16x16)
    x = jax.random.normal(key, (2, 4, 16, 16), dtype=jnp.float32)

    for a_bit in (4, 1, 32):
        got = lifequant_forward(x, a_bit)
        got = jax.block_until_ready(got)
        ref = lifequant_reference(x, a_bit)
        if a_bit == 32:
            assert bool(jnp.array_equal(got, ref))
        else:
            step = 1.0 / (2 ** a_bit - 1)
            diff = jnp.abs(got - ref)
            # Allow at most a couple of single-step flips caused by fp
            # summation-order differences (Pallas partial sums vs jnp.sum)
            # landing exactly on a rounding boundary.
            assert int(jnp.sum(diff > 1e-5)) <= 2, f"a_bit={a_bit}"
            assert float(jnp.max(diff)) <= step + 1e-5, f"a_bit={a_bit}"

    print("KERNEL_OK")
</pallas_src>

<mosaic_0001>
module attributes {stable_mosaic.version = 11 : i64} {
  func.func @_stats_kernel(%arg0: i32, %arg1: memref<4x512xf32, #tpu.memory_space<vmem>>, %arg2: memref<1x512xf32, #tpu.memory_space<vmem>>, %arg3: memref<1x512xf32, #tpu.memory_space<vmem>>) attributes {dimension_semantics = [#tpu.dimension_semantics<arbitrary>], iteration_bounds = array<i64: 1>, scalar_prefetch = 0 : i64, scratch_operands = 0 : i64, tpu.core_type = #tpu.core_type<tc>, window_params = [{transform_indices = @transform_0, window_bounds = array<i64: 4, 512>}, {pipeline_mode = #tpu.pipeline_mode<synchronous>, transform_indices = @transform_1, window_bounds = array<i64: 1, 512>}, {pipeline_mode = #tpu.pipeline_mode<synchronous>, transform_indices = @transform_2, window_bounds = array<i64: 1, 512>}]} {
    %c0_i32 = arith.constant 0 : i32
    %0 = arith.cmpi eq, %arg0, %c0_i32 : i32
    %1 = arith.extui %0 : i1 to i32
    %c0_i32_0 = arith.constant 0 : i32
    %2 = arith.cmpi ne, %1, %c0_i32_0 : i32
    scf.if %2 {
      %cst_11 = arith.constant 0.000000e+00 : f32
      %15 = vector.broadcast %cst_11 : f32 to vector<1x512xf32>
      %c0_12 = arith.constant 0 : index
      %c0_13 = arith.constant 0 : index
      %16 = vector.load %arg2[%c0_12, %c0_13] : memref<1x512xf32, #tpu.memory_space<vmem>>, vector<1x512xf32>
      tpu.vector_store %arg2[%c0_12, %c0_13], %15 {strides = array<i32>} : memref<1x512xf32, #tpu.memory_space<vmem>>, vector<1x512xf32>,
      %cst_14 = arith.constant 0.000000e+00 : f32
      %17 = vector.broadcast %cst_14 : f32 to vector<1x512xf32>
      %c0_15 = arith.constant 0 : index
      %c0_16 = arith.constant 0 : index
      %18 = vector.load %arg3[%c0_15, %c0_16] : memref<1x512xf32, #tpu.memory_space<vmem>>, vector<1x512xf32>
      tpu.vector_store %arg3[%c0_15, %c0_16], %17 {strides = array<i32>} : memref<1x512xf32, #tpu.memory_space<vmem>>, vector<1x512xf32>,
    } else {
    }
    %c0 = arith.constant 0 : index
    %c0_1 = arith.constant 0 : index
    %3 = vector.load %arg1[%c0, %c0_1] : memref<4x512xf32, #tpu.memory_space<vmem>>, vector<4x512xf32>
    %c0_2 = arith.constant 0 : index
    %c0_3 = arith.constant 0 : index
    %4 = vector.load %arg2[%c0_2, %c0_3] : memref<1x512xf32, #tpu.memory_space<vmem>>, vector<1x512xf32>
    %cst = arith.constant dense<0.000000e+00> : vector<512xf32>
    %5 = vector.multi_reduction <add>, %3, %cst [0] : vector<4x512xf32> to vector<512xf32>
    %6 = vector.shape_cast %5 : vector<512xf32> to vector<1x512xf32>
    %7 = arith.addf %4, %6 : vector<1x512xf32>
    %c0_4 = arith.constant 0 : index
    %c0_5 = arith.constant 0 : index
    %8 = vector.load %arg2[%c0_4, %c0_5] : memref<1x512xf32, #tpu.memory_space<vmem>>, vector<1x512xf32>
    tpu.vector_store %arg2[%c0_4, %c0_5], %7 {strides = array<i32>} : memref<1x512xf32, #tpu.memory_space<vmem>>, vector<1x512xf32>,
    %c0_6 = arith.constant 0 : index
    %c0_7 = arith.constant 0 : index
    %9 = vector.load %arg3[%c0_6, %c0_7] : memref<1x512xf32, #tpu.memory_space<vmem>>, vector<1x512xf32>
    %10 = arith.mulf %3, %3 : vector<4x512xf32>
    %cst_8 = arith.constant dense<0.000000e+00> : vector<512xf32>
    %11 = vector.multi_reduction <add>, %10, %cst_8 [0] : vector<4x512xf32> to vector<512xf32>
    %12 = vector.shape_cast %11 : vector<512xf32> to vector<1x512xf32>
    %13 = arith.addf %9, %12 : vector<1x512xf32>
    %c0_9 = arith.constant 0 : index
    %c0_10 = arith.constant 0 : index
    %14 = vector.load %arg3[%c0_9, %c0_10] : memref<1x512xf32, #tpu.memory_space<vmem>>, vector<1x512xf32>
    tpu.vector_store %arg3[%c0_9, %c0_10], %13 {strides = array<i32>} : memref<1x512xf32, #tpu.memory_space<vmem>>, vector<1x512xf32>,
    return
  }
  func.func @transform_0(%arg0: i32) -> (i32, i32) {
    %c0_i32 = arith.constant 0 : i32
    %c0_i32_0 = arith.constant 0 : i32
    return %arg0, %c0_i32 : i32, i32
  }
  func.func @transform_1(%arg0: i32) -> (i32, i32) {
    %c0_i32 = arith.constant 0 : i32
    %c0_i32_0 = arith.constant 0 : i32
    %c0_i32_1 = arith.constant 0 : i32
    return %c0_i32, %c0_i32_0 : i32, i32
  }
  func.func @transform_2(%arg0: i32) -> (i32, i32) {
    %c0_i32 = arith.constant 0 : i32
    %c0_i32_0 = arith.constant 0 : i32
    %c0_i32_1 = arith.constant 0 : i32
    return %c0_i32, %c0_i32_0 : i32, i32
  }
}

module attributes {stable_mosaic.version = 11 : i64} {
  func.func @_quant_kernel(%arg0: i32, %arg1: memref<2xf32, #tpu.memory_space<smem>>, %arg2: memref<4x512xf32, #tpu.memory_space<vmem>>, %arg3: memref<4x512xf32, #tpu.memory_space<vmem>>) attributes {dimension_semantics = [#tpu.dimension_semantics<parallel>], iteration_bounds = array<i64: 1>, scalar_prefetch = 0 : i64, scratch_operands = 0 : i64, tpu.core_type = #tpu.core_type<tc>, window_params = [{transform_indices = @transform_0, window_bounds = array<i64: 2>}, {transform_indices = @transform_1, window_bounds = array<i64: 4, 512>}, {transform_indices = @transform_2, window_bounds = array<i64: 4, 512>}]} {
    %c0 = arith.constant 0 : index
    %0 = memref.load %arg1[%c0] : memref<2xf32, #tpu.memory_space<smem>>
    %c1 = arith.constant 1 : index
    %1 = memref.load %arg1[%c1] : memref<2xf32, #tpu.memory_space<smem>>
    %c0_0 = arith.constant 0 : index
    %c0_1 = arith.constant 0 : index
    %2 = vector.load %arg2[%c0_0, %c0_1] : memref<4x512xf32, #tpu.memory_space<vmem>>, vector<4x512xf32>
    %3 = vector.broadcast %0 : f32 to vector<4x512xf32>
    %4 = arith.subf %2, %3 : vector<4x512xf32>
    %5 = vector.broadcast %1 : f32 to vector<4x512xf32>
    %6 = arith.mulf %4, %5 : vector<4x512xf32>
    %cst = arith.constant 0.000000e+00 : f32
    %cst_2 = arith.constant 1.000000e+00 : f32
    %7 = vector.broadcast %cst : f32 to vector<4x512xf32>
    %8 = arith.maximumf %7, %6 : vector<4x512xf32>
    %9 = vector.broadcast %cst_2 : f32 to vector<4x512xf32>
    %10 = arith.minimumf %9, %8 : vector<4x512xf32>
    %cst_3 = arith.constant 1.500000e+01 : f32
    %11 = vector.broadcast %cst_3 : f32 to vector<4x512xf32>
    %12 = arith.mulf %10, %11 : vector<4x512xf32>
    %13 = math.roundeven %12 : vector<4x512xf32>
    %cst_4 = arith.constant 0.0666666701 : f32
    %14 = vector.broadcast %cst_4 : f32 to vector<4x512xf32>
    %15 = arith.mulf %13, %14 : vector<4x512xf32>
    %c0_5 = arith.constant 0 : index
    %c0_6 = arith.constant 0 : index
    %16 = vector.load %arg3[%c0_5, %c0_6] : memref<4x512xf32, #tpu.memory_space<vmem>>, vector<4x512xf32>
    tpu.vector_store %arg3[%c0_5, %c0_6], %15 {strides = array<i32>} : memref<4x512xf32, #tpu.memory_space<vmem>>, vector<4x512xf32>,
    return
  }
  func.func @transform_0(%arg0: i32) -> i32 {
    %c0_i32 = arith.constant 0 : i32
    %c0_i32_0 = arith.constant 0 : i32
    return %c0_i32 : i32
  }
  func.func @transform_1(%arg0: i32) -> (i32, i32) {
    %c0_i32 = arith.constant 0 : i32
    %c0_i32_0 = arith.constant 0 : i32
    return %arg0, %c0_i32 : i32, i32
  }
  func.func @transform_2(%arg0: i32) -> (i32, i32) {
    %c0_i32 = arith.constant 0 : i32
    %c0_i32_0 = arith.constant 0 : i32
    return %arg0, %c0_i32 : i32, i32
  }
}

</mosaic_0001>

<llo_original>
// kernel: _lifequant_impl.3
$region0: #{_lifequant_impl.3}
  #allocation0 [shape = 'u32[]', space=smem, size = 0x4, offset = 0x4, fixed_abs, tag = 'smem constant byte address 0x4 - core index']
  #allocation1 [shape = 'u32[72,128]{1,0:T(1,128)}', space=vmem, size = 0x9000, scoped, tag = 'internal scratch']
  %s0 = inlined_call_operand.vmem [shape: f32[2], index: 0, kind: input, shape index: {}]
  %s1 = inlined_call_operand.vmem [shape: f32[4,512], index: 1, kind: input, shape index: {}]
  %s2 = inlined_call_operand.vmem [shape: f32[4,512], index: 2, kind: output, shape index: {}]
  %s3 = sld [smem:[#allocation0]]
  $region22: #{_lifequant_impl.3} parent=0
    _
  %s5 = ssub.s32 1, %s3
  %s6 = scalar_select 0, %s5, %s3
  $region1: #{_lifequant_impl.3} parent=0
    #allocation2 [shape = 'u8[512]{0}', space=smem, size = 0x200, scoped, tag = 'input window, operand 0, single buffered']
    #allocation3 [shape = 's32[1]{0}', space=sflag, size = 0x4, scoped, tag = 'scoped memory for _lifequant_impl.3']
    %7 = vsyncpa [#allocation3], 0
    // Predicated region
    $region2: #{_lifequant_impl.3} parent=1 // pred_check
      _
    $region3: #{_lifequant_impl.3} parent=1 // pred_check_branch
      %9 = sbr.rel (0) target = $region5
    $region4: #{_lifequant_impl.3} parent=1 // pred_region
      %11 = vsyncadd [#allocation3], 0
      %s13 = sshll.u32 %s0, 4
      %s14 = int_to_ptr.vmem [resolvable:$true] %s13
      %16 = dma.vmem_to_smem %s14, 16, [#allocation2], [#allocation3]
    $region5: #{_lifequant_impl.3} parent=1 // pred_fallthru
      _
    // Predicated region
    $region6: #{_lifequant_impl.3} parent=1 // pred_check
      _
    $region7: #{_lifequant_impl.3} parent=1 // pred_check_branch
      %18 = sbr.rel (0) target = $region9
    $region8: #{_lifequant_impl.3} parent=1 // pred_region
      _
    $region9: #{_lifequant_impl.3} parent=1 // pred_fallthru
      _
    // Predicated region
    $region10: #{_lifequant_impl.3} parent=1 // pred_check
      _
    $region11: #{_lifequant_impl.3} parent=1 // pred_check_branch
      %20 = sbr.rel (0) target = $region13
    $region12: #{_lifequant_impl.3} parent=1 // pred_region
      %22 = dma.done [#allocation3], 16
    $region13: #{_lifequant_impl.3} parent=1 // pred_fallthru
      _
    %23 = sfence
    %s24 = sld [smem:[#allocation2]]
    %s25 = sld [smem:[#allocation2 + $0x1]]
    %v26 = vld [vmem:[%s1] sm:$0xff]
    %v27 = vld [vmem:[%s1 + $0x8] sm:$0xff]
    %v28 = vstv %s24
    %v29 = vsub.f32 %v26, %v28
    %v30 = vsub.f32 %v27, %v28
    %v31 = vstv %s25
    %v32 = vmul.f32 %v29, %v31
    %v33 = vmul.f32 %v30, %v31
    %v34 = vmax.f32 %v32, 0.0
    %v35 = vmax.f32 %v33, 0.0
    %v36 = vmin.f32 %v34, 1.0
    %v37 = vmin.f32 %v35, 1.0
    %v38 = vmul.f32 %v36, 15.0
    %v39 = vmul.f32 %v37, 15.0
    %v40 = vround.ne.pseudo %v38
    %v41 = vround.ne.pseudo %v39
    %v42 = vmul.f32 %v40, 0.06666667
    %v43 = vmul.f32 %v41, 0.06666667
    %44 = vst [vmem:[%s2] sm:$0xff] %v42
    %45 = vst [vmem:[%s2 + $0x8] sm:$0xff] %v43
    // Predicated region
    $region14: #{_lifequant_impl.3} parent=1 // pred_check
      _
    $region15: #{_lifequant_impl.3} parent=1 // pred_check_branch
      %47 = sbr.rel (0) target = $region17
    $region16: #{_lifequant_impl.3} parent=1 // pred_region
      _
    $region17: #{_lifequant_impl.3} parent=1 // pred_fallthru
      _
    // Predicated region
    $region18: #{_lifequant_impl.3} parent=1 // pred_check
      _
    $region19: #{_lifequant_impl.3} parent=1 // pred_check_branch
      %49 = sbr.rel (0) target = $region21
    $region20: #{_lifequant_impl.3} parent=1 // pred_region
      _
    $region21: #{_lifequant_impl.3} parent=1 // pred_fallthru
      _
    %50 = vsyncpa [#allocation3], 1

// kernel: _lifequant_impl.2
$region0: #{_lifequant_impl.2}
  #allocation0 [shape = 'u32[]', space=smem, size = 0x4, offset = 0x4, fixed_abs, tag = 'smem constant byte address 0x4 - core index']
  #allocation1 [shape = 'u32[72,128]{1,0:T(1,128)}', space=vmem, size = 0x9000, scoped, tag = 'internal scratch']
  %s0 = inlined_call_operand.vmem [shape: f32[4,512], index: 0, kind: input, shape index: {}]
  %s1 = inlined_call_operand.vmem [shape: f32[1,512], index: 1, kind: output, shape index: {0}]
  %s2 = inlined_call_operand.vmem [shape: f32[1,512], index: 2, kind: output, shape index: {1}]
  %3 = xla_tuple %s1, %s2
  %s4 = sld [smem:[#allocation0]]
  $region26: #{_lifequant_impl.2} parent=0
    _
  %s6 = ssub.s32 1, %s4
  %s7 = scalar_select 0, %s6, %s4
  // Predicated region
  $region2: #{_lifequant_impl.2} parent=0 // pred_check
    _
  $region3: #{_lifequant_impl.2} parent=0 // pred_check_branch
    %9 = sbr.rel (0) target = $region5
  $region4: #{_lifequant_impl.2} parent=0 // pred_region
    _
  $region5: #{_lifequant_impl.2} parent=0 // pred_fallthru
    _
  %p10 = scmp.eq.s32.totalorder 0, 0
  // Predicated region
  $region6: #{_lifequant_impl.2} parent=0 // pred_check
    %p11 = pneg %p10
  $region7: #{_lifequant_impl.2} parent=0 // pred_check_branch
    %13 = sbr.rel (%p11) target = $region9
  $region8: #{_lifequant_impl.2} parent=0 // pred_region
    %v14 = vlaneseq
    %vm15 = vcmp.ge.s32.totalorder %v14, 0
    %vm16 = vcmp.lt.s32.totalorder %v14, 512
    %vm17 = vmand %vm15, %vm16
    %18 = vst.msk [vmem:[%s1] sm:$0xf] %vm17, 0.0
    %19 = vst.msk [vmem:[%s2] sm:$0xf] %vm17, 0.0
  $region9: #{_lifequant_impl.2} parent=0 // pred_fallthru
    _
  %v20 = vld [vmem:[%s0] sm:$0xff]
  %v21 = vld [vmem:[%s0 + $0x8] sm:$0xff]
  %v22 = vld [vmem:[%s1] sm:$0xf]
  %25 = vst [vmem:[#allocation1] ss:$2 sm:$0xff] %v20
  %s26 = scalar_lea.vmem [#allocation1], 16
  %27 = vst [vmem:[%s26] ss:$2 sm:$0xff] %v21
  %v28 = vld.sshfl [vmem:[#allocation1] sm:$0xff pattern:$0x75316420]
  %v29 = vld.sshfl [vmem:[#allocation1 + $0x8] sm:$0xff pattern:$0x75316420]
  %v30 = vld.sshfl [vmem:[#allocation1 + $0x10] sm:$0xff pattern:$0x75316420]
  %v31 = vld.sshfl [vmem:[#allocation1 + $0x18] sm:$0xff pattern:$0x75316420]
  %vm36 = vcmask 1043456
  %v37 = vsel %vm36, %v28, 0.0
  %v38 = vrot.slane %v37, 4
  %v39 = vadd.f32 %v37, %v38
  %v40 = vrot.slane %v39, 2
  %v41 = vadd.f32 %v39, %v40
  %v42 = vrot.slane %v41, 1
  %v43 = vadd.f32 %v41, %v42
  %v44 = vsel %vm36, %v29, 0.0
  %v45 = vrot.slane %v44, 4
  %v46 = vadd.f32 %v44, %v45
  %v47 = vrot.slane %v46, 2
  %v48 = vadd.f32 %v46, %v47
  %v49 = vrot.slane %v48, 1
  %v50 = vadd.f32 %v48, %v49
  %v51 = vsel %vm36, %v30, 0.0
  %v52 = vrot.slane %v51, 4
  %v53 = vadd.f32 %v51, %v52
  %v54 = vrot.slane %v53, 2
  %v55 = vadd.f32 %v53, %v54
  %v56 = vrot.slane %v55, 1
  %v57 = vadd.f32 %v55, %v56
  %v58 = vsel %vm36, %v31, 0.0
  %v59 = vrot.slane %v58, 4
  %v60 = vadd.f32 %v58, %v59
  %v61 = vrot.slane %v60, 2
  %v62 = vadd.f32 %v60, %v61
  %v63 = vrot.slane %v62, 1
  %v64 = vadd.f32 %v62, %v63
  %v69 = vrot.slane %v50, 7
  %v70 = vrot.slane %v57, 6
  %v71 = vrot.slane %v64, 5
  %vm72 = vcmask 1040384
  %v73 = vsel %vm72, %v43, %v69
  %vm74 = vcmask 1042434
  %v75 = vsel %vm74, %v70, %v71
  %vm76 = vcmask 1041408
  %v77 = vsel %vm76, %v73, %v75
  %v79 = vadd.f32 %v22, %v77
  %v80 = vlaneseq
  %vm81 = vcmp.ge.s32.totalorder %v80, 0
  %vm82 = vcmp.lt.s32.totalorder %v80, 512
  %vm83 = vmand %vm81, %vm82
  %84 = vst.msk [vmem:[%s1] sm:$0xf] %vm83, %v79
  %v85 = vld [vmem:[%s2] sm:$0xf]
  %v86 = vmul.f32 %v20, %v20
  %v87 = vmul.f32 %v21, %v21
  %90 = vst [vmem:[#allocation1] ss:$2 sm:$0xff] %v86
  %s91 = scalar_lea.vmem [#allocation1], 16
  %92 = vst [vmem:[%s91] ss:$2 sm:$0xff] %v87
  %v93 = vld.sshfl [vmem:[#allocation1] sm:$0xff pattern:$0x75316420]
  %v94 = vld.sshfl [vmem:[#allocation1 + $0x8] sm:$0xff pattern:$0x75316420]
  %v95 = vld.sshfl [vmem:[#allocation1 + $0x10] sm:$0xff pattern:$0x75316420]
  %v96 = vld.sshfl [vmem:[#allocation1 + $0x18] sm:$0xff pattern:$0x75316420]
  %v101 = vsel %vm36, %v93, 0.0
  %v102 = vrot.slane %v101, 4
  %v103 = vadd.f32 %v101, %v102
  %v104 = vrot.slane %v103, 2
  %v105 = vadd.f32 %v103, %v104
  %v106 = vrot.slane %v105, 1
  %v107 = vadd.f32 %v105, %v106
  %v108 = vsel %vm36, %v94, 0.0
  %v109 = vrot.slane %v108, 4
  %v110 = vadd.f32 %v108, %v109
  %v111 = vrot.slane %v110, 2
  %v112 = vadd.f32 %v110, %v111
  %v113 = vrot.slane %v112, 1
  %v114 = vadd.f32 %v112, %v113
  %v115 = vsel %vm36, %v95, 0.0
  %v116 = vrot.slane %v115, 4
  %v117 = vadd.f32 %v115, %v116
  %v118 = vrot.slane %v117, 2
  %v119 = vadd.f32 %v117, %v118
  %v120 = vrot.slane %v119, 1
  %v121 = vadd.f32 %v119, %v120
  %v122 = vsel %vm36, %v96, 0.0
  %v123 = vrot.slane %v122, 4
  %v124 = vadd.f32 %v122, %v123
  %v125 = vrot.slane %v124, 2
  %v126 = vadd.f32 %v124, %v125
  %v127 = vrot.slane %v126, 1
  %v128 = vadd.f32 %v126, %v127
  %v133 = vrot.slane %v114, 7
  %v134 = vrot.slane %v121, 6
  %v135 = vrot.slane %v128, 5
  %v136 = vsel %vm72, %v107, %v133
  %v137 = vsel %vm74, %v134, %v135
  %v138 = vsel %vm76, %v136, %v137
  %v140 = vadd.f32 %v85, %v138
  %141 = vst.msk [vmem:[%s2] sm:$0xf] %vm83, %v140
  // Predicated region
  $region10: #{_lifequant_impl.2} parent=0 // pred_check
    _
  $region11: #{_lifequant_impl.2} parent=0 // pred_check_branch
    %143 = sbr.rel (0) target = $region13
  $region12: #{_lifequant_impl.2} parent=0 // pred_region
    _
  $region13: #{_lifequant_impl.2} parent=0 // pred_fallthru
    _
  // Predicated region
  $region14: #{_lifequant_impl.2} parent=0 // pred_check
    _
  $region15: #{_lifequant_impl.2} parent=0 // pred_check_branch
    %145 = sbr.rel (0) target = $region17
  $region16: #{_lifequant_impl.2} parent=0 // pred_region
    _
  $region17: #{_lifequant_impl.2} parent=0 // pred_fallthru
    _
  // Predicated region
  $region18: #{_lifequant_impl.2} parent=0 // pred_check
    _
  $region19: #{_lifequant_impl.2} parent=0 // pred_check_branch
    %147 = sbr.rel (0) target = $region21
  $region20: #{_lifequant_impl.2} parent=0 // pred_region
    _
  $region21: #{_lifequant_impl.2} parent=0 // pred_fallthru
    _
  // Predicated region
  $region22: #{_lifequant_impl.2} parent=0 // pred_check
    _
  $region23: #{_lifequant_impl.2} parent=0 // pred_check_branch
    %149 = sbr.rel (0) target = $region25
  $region24: #{_lifequant_impl.2} parent=0 // pred_region
    _
  $region25: #{_lifequant_impl.2} parent=0 // pred_fallthru
    _

</llo_original>
